<compile_context>
chip_gen: v7x
topology: tpu7x:2x2x1
jax: 0.10.0
libtpu: 0.0.40
codegen_flags: <defaults>
</compile_context>

<pallas_src>
import math

import jax
import jax.numpy as jnp
from jax.experimental import pallas as pl
from jax.experimental.pallas import tpu as pltpu


def _add_kernel(x_ref, k_ref, o_ref):
    # x_ref: (B, P, HW), k_ref: (P, C), o_ref: (B, P, C*HW)
    x = x_ref[...]                                   # (B, P, HW), stays in vregs
    C = k_ref.shape[1]
    HW = x_ref.shape[-1]
    for c in range(C):                               # static unroll, C is tiny
        k_col = k_ref[:, pl.ds(c, 1)]                # (P, 1) column
        # lane-broadcast (1, P, 1) against (B, P, HW): pure VPU, no XLU traffic
        o_ref[:, :, pl.ds(c * HW, HW)] = x + k_col[None, :, :]


def add_forward(x, k):
    """x: (B, P, H, W), k: (kh, kw, in_channels, filters) -> (B, P, C, H, W)."""
    B, P, H, W = x.shape
    kh, kw, in_c, C = k.shape
    assert P == kh * kw * in_c, "patch dim of x must equal kh*kw*in_channels"

    HW = H * W
    x_flat = x.reshape(B, P, HW)
    k_flat = k.reshape(P, C)

    out_flat = pl.pallas_call(
        _add_kernel,
        out_shape=jax.ShapeDtypeStruct((B, P, C * HW), x.dtype),
        grid_spec=pltpu.PrefetchScalarGridSpec(
            num_scalar_prefetch=0,
            grid=(1,),  # single resident block: whole problem is ~270 KiB
            in_specs=[
                pl.BlockSpec((B, P, HW), lambda i: (0, 0, 0)),
                pl.BlockSpec((P, C), lambda i: (0, 0)),
            ],
            out_specs=pl.BlockSpec((B, P, C * HW), lambda i: (0, 0, 0)),
        ),
        compiler_params=pltpu.CompilerParams(
            dimension_semantics=("arbitrary",),
        ),
    )(x_flat, k_flat)

    # Contiguous (free) reshape back to the PyTorch output layout.
    return out_flat.reshape(B, P, C, H, W)


def xavier_uniform(key, shape, dtype=jnp.float32):
    # PyTorch xavier_uniform_ for a 4D tensor (kh, kw, in_c, filters):
    #   fan_in  = shape[1] * prod(shape[2:])
    #   fan_out = shape[0] * prod(shape[2:])
    receptive = 1
    for s in shape[2:]:
        receptive *= s
    fan_in = shape[1] * receptive
    fan_out = shape[0] * receptive
    bound = math.sqrt(6.0 / (fan_in + fan_out))
    return jax.random.uniform(key, shape, dtype=dtype, minval=-bound, maxval=bound)


if __name__ == "__main__":
    # Module config: filters=4, input_shape=(in_channels, ...), kernel_size=(3, 3)
    filters = 4
    in_channels = 3
    kh, kw = 3, 3
    B, H, W = 2, 16, 16
    P = kh * kw * in_channels  # 27

    key = jax.random.PRNGKey(0)
    kx, kk = jax.random.split(key)

    x = jax.random.normal(kx, (B, P, H, W), dtype=jnp.float32)
    k = xavier_uniform(kk, (kh, kw, in_channels, filters), dtype=jnp.float32)

    out = add_forward(x, k)
    out = jax.block_until_ready(out)

    # Reference check (plain JAX broadcast, mirrors the PyTorch forward).
    ref = x[:, :, None, :, :] + k.reshape(P, filters)[None, :, :, None, None]
    assert out.shape == (B, P, filters, H, W)
    assert jnp.allclose(out, ref, atol=1e-6), "mismatch vs reference"

    print("KERNEL_OK")
</pallas_src>

<mosaic_0001>
module attributes {stable_mosaic.version = 11 : i64} {
  func.func @_add_kernel(%arg0: i32, %arg1: memref<2x27x256xf32, #tpu.memory_space<vmem>>, %arg2: memref<27x4xf32, #tpu.memory_space<vmem>>, %arg3: memref<2x27x1024xf32, #tpu.memory_space<vmem>>) attributes {dimension_semantics = [#tpu.dimension_semantics<arbitrary>], iteration_bounds = array<i64: 1>, scalar_prefetch = 0 : i64, scratch_operands = 0 : i64, tpu.core_type = #tpu.core_type<tc>, window_params = [{pipeline_mode = #tpu.pipeline_mode<synchronous>, transform_indices = @transform_0, window_bounds = array<i64: 2, 27, 256>}, {pipeline_mode = #tpu.pipeline_mode<synchronous>, transform_indices = @transform_1, window_bounds = array<i64: 27, 4>}, {pipeline_mode = #tpu.pipeline_mode<synchronous>, transform_indices = @transform_2, window_bounds = array<i64: 2, 27, 1024>}]} {
    %c0 = arith.constant 0 : index
    %c0_0 = arith.constant 0 : index
    %c0_1 = arith.constant 0 : index
    %0 = vector.load %arg1[%c0, %c0_0, %c0_1] : memref<2x27x256xf32, #tpu.memory_space<vmem>>, vector<2x27x256xf32>
    %c0_2 = arith.constant 0 : index
    %c0_3 = arith.constant 0 : index
    %1 = vector.load %arg2[%c0_2, %c0_3] : memref<27x4xf32, #tpu.memory_space<vmem>>, vector<27x1xf32>
    %2 = vector.shape_cast %1 : vector<27x1xf32> to vector<1x27x1xf32>
    %3 = vector.broadcast %2 : vector<1x27x1xf32> to vector<2x27x256xf32>
    %4 = arith.addf %0, %3 : vector<2x27x256xf32>
    %c0_4 = arith.constant 0 : index
    %c0_5 = arith.constant 0 : index
    %c0_6 = arith.constant 0 : index
    %5 = vector.load %arg3[%c0_4, %c0_5, %c0_6] : memref<2x27x1024xf32, #tpu.memory_space<vmem>>, vector<2x27x256xf32>
    tpu.vector_store %arg3[%c0_4, %c0_5, %c0_6], %4 {strides = array<i32>} : memref<2x27x1024xf32, #tpu.memory_space<vmem>>, vector<2x27x256xf32>,
    %c0_7 = arith.constant 0 : index
    %c1 = arith.constant 1 : index
    %6 = vector.load %arg2[%c0_7, %c1] : memref<27x4xf32, #tpu.memory_space<vmem>>, vector<27x1xf32>
    %7 = vector.shape_cast %6 : vector<27x1xf32> to vector<1x27x1xf32>
    %8 = vector.broadcast %7 : vector<1x27x1xf32> to vector<2x27x256xf32>
    %9 = arith.addf %0, %8 : vector<2x27x256xf32>
    %c0_8 = arith.constant 0 : index
    %c0_9 = arith.constant 0 : index
    %c256 = arith.constant 256 : index
    %10 = vector.load %arg3[%c0_8, %c0_9, %c256] : memref<2x27x1024xf32, #tpu.memory_space<vmem>>, vector<2x27x256xf32>
    tpu.vector_store %arg3[%c0_8, %c0_9, %c256], %9 {strides = array<i32>} : memref<2x27x1024xf32, #tpu.memory_space<vmem>>, vector<2x27x256xf32>,
    %c0_10 = arith.constant 0 : index
    %c2 = arith.constant 2 : index
    %11 = vector.load %arg2[%c0_10, %c2] : memref<27x4xf32, #tpu.memory_space<vmem>>, vector<27x1xf32>
    %12 = vector.shape_cast %11 : vector<27x1xf32> to vector<1x27x1xf32>
    %13 = vector.broadcast %12 : vector<1x27x1xf32> to vector<2x27x256xf32>
    %14 = arith.addf %0, %13 : vector<2x27x256xf32>
    %c0_11 = arith.constant 0 : index
    %c0_12 = arith.constant 0 : index
    %c512 = arith.constant 512 : index
    %15 = vector.load %arg3[%c0_11, %c0_12, %c512] : memref<2x27x1024xf32, #tpu.memory_space<vmem>>, vector<2x27x256xf32>
    tpu.vector_store %arg3[%c0_11, %c0_12, %c512], %14 {strides = array<i32>} : memref<2x27x1024xf32, #tpu.memory_space<vmem>>, vector<2x27x256xf32>,
    %c0_13 = arith.constant 0 : index
    %c3 = arith.constant 3 : index
    %16 = vector.load %arg2[%c0_13, %c3] : memref<27x4xf32, #tpu.memory_space<vmem>>, vector<27x1xf32>
    %17 = vector.shape_cast %16 : vector<27x1xf32> to vector<1x27x1xf32>
    %18 = vector.broadcast %17 : vector<1x27x1xf32> to vector<2x27x256xf32>
    %19 = arith.addf %0, %18 : vector<2x27x256xf32>
    %c0_14 = arith.constant 0 : index
    %c0_15 = arith.constant 0 : index
    %c768 = arith.constant 768 : index
    %20 = vector.load %arg3[%c0_14, %c0_15, %c768] : memref<2x27x1024xf32, #tpu.memory_space<vmem>>, vector<2x27x256xf32>
    tpu.vector_store %arg3[%c0_14, %c0_15, %c768], %19 {strides = array<i32>} : memref<2x27x1024xf32, #tpu.memory_space<vmem>>, vector<2x27x256xf32>,
    return
  }
  func.func @transform_0(%arg0: i32) -> (i32, i32, i32) {
    %c0_i32 = arith.constant 0 : i32
    %c0_i32_0 = arith.constant 0 : i32
    %c0_i32_1 = arith.constant 0 : i32
    %c0_i32_2 = arith.constant 0 : i32
    return %c0_i32, %c0_i32_0, %c0_i32_1 : i32, i32, i32
  }
  func.func @transform_1(%arg0: i32) -> (i32, i32) {
    %c0_i32 = arith.constant 0 : i32
    %c0_i32_0 = arith.constant 0 : i32
    %c0_i32_1 = arith.constant 0 : i32
    return %c0_i32, %c0_i32_0 : i32, i32
  }
  func.func @transform_2(%arg0: i32) -> (i32, i32, i32) {
    %c0_i32 = arith.constant 0 : i32
    %c0_i32_0 = arith.constant 0 : i32
    %c0_i32_1 = arith.constant 0 : i32
    %c0_i32_2 = arith.constant 0 : i32
    return %c0_i32, %c0_i32_0, %c0_i32_1 : i32, i32, i32
  }
}

</mosaic_0001>

<llo_original>
// kernel: tpu_custom_call.1
$region0: #{tpu_custom_call.1}
  #allocation0 [shape = 'u32[]', space=smem, size = 0x4, offset = 0x4, fixed_abs, tag = 'smem constant byte address 0x4 - core index']
  #allocation1 [shape = 'u32[144,128]{1,0:T(1,128)}', space=vmem, size = 0x12000, scoped, tag = 'internal scratch']
  %s0 = inlined_call_operand.vmem [shape: f32[2,27,256], index: 0, kind: input, shape index: {}]
  %s1 = inlined_call_operand.vmem [shape: f32[27,4], index: 1, kind: input, shape index: {}]
  %s2 = inlined_call_operand.vmem [shape: f32[2,27,1024], index: 2, kind: output, shape index: {}]
  %s3 = sld [smem:[#allocation0]]
  $region18: #{tpu_custom_call.1} parent=0
    _
  %s5 = ssub.s32 1, %s3
  %s6 = scalar_select 0, %s5, %s3
  // Predicated region
  $region2: #{tpu_custom_call.1} parent=0 // pred_check
    _
  $region3: #{tpu_custom_call.1} parent=0 // pred_check_branch
    %8 = sbr.rel (0) target = $region5
  $region4: #{tpu_custom_call.1} parent=0 // pred_region
    _
  $region5: #{tpu_custom_call.1} parent=0 // pred_fallthru
    _
  // Predicated region
  $region6: #{tpu_custom_call.1} parent=0 // pred_check
    _
  $region7: #{tpu_custom_call.1} parent=0 // pred_check_branch
    %10 = sbr.rel (0) target = $region9
  $region8: #{tpu_custom_call.1} parent=0 // pred_region
    _
  $region9: #{tpu_custom_call.1} parent=0 // pred_fallthru
    _
  %v11 = vld [vmem:[%s0] sm:$0xff]
  %v12 = vld [vmem:[%s0 + $0x8] sm:$0xff]
  %v13 = vld [vmem:[%s0 + $0x10] sm:$0xff]
  %v14 = vld [vmem:[%s0 + $0x18] sm:$0xff]
  %v15 = vld [vmem:[%s0 + $0x20] sm:$0xff]
  %v16 = vld [vmem:[%s0 + $0x28] sm:$0xff]
  %v17 = vld [vmem:[%s0 + $0x30] sm:$0x7]
  %v18 = vld [vmem:[%s0 + $0x38] sm:$0x7]
  %v19 = vld [vmem:[%s0 + $0x40] sm:$0xff]
  %v20 = vld [vmem:[%s0 + $0x48] sm:$0xff]
  %v21 = vld [vmem:[%s0 + $0x50] sm:$0xff]
  %v22 = vld [vmem:[%s0 + $0x58] sm:$0xff]
  %v23 = vld [vmem:[%s0 + $0x60] sm:$0xff]
  %v24 = vld [vmem:[%s0 + $0x68] sm:$0xff]
  %v25 = vld [vmem:[%s0 + $0x70] sm:$0x7]
  %v26 = vld [vmem:[%s0 + $0x78] sm:$0x7]
  %v27 = vld [vmem:[%s1] sm:$0xff]
  %v28 = vld [vmem:[%s1 + $0x8] sm:$0xff]
  %v29 = vld [vmem:[%s1 + $0x10] sm:$0xff]
  %v30 = vld [vmem:[%s1 + $0x18] sm:$0x7]
  %32 = vset.pattern.permute.xlu0 0
  %33 = vperm.xlu0 %32, %v27
  %v34 = vpop.permute.xlu0 %33
  %37 = vset.pattern.permute.xlu0 0
  %38 = vperm.xlu0 %37, %v28
  %v39 = vpop.permute.xlu0 %38
  %42 = vset.pattern.permute.xlu0 0
  %43 = vperm.xlu0 %42, %v29
  %v44 = vpop.permute.xlu0 %43
  %47 = vset.pattern.permute.xlu0 0
  %48 = vperm.xlu0 %47, %v30
  %v49 = vpop.permute.xlu0 %48
  %v51 = vadd.f32 %v11, %v34
  %v52 = vadd.f32 %v12, %v34
  %v53 = vadd.f32 %v13, %v39
  %v54 = vadd.f32 %v14, %v39
  %v55 = vadd.f32 %v15, %v44
  %v56 = vadd.f32 %v16, %v44
  %v57 = vadd.f32 %v17, %v49
  %v58 = vadd.f32 %v18, %v49
  %v59 = vadd.f32 %v19, %v34
  %v60 = vadd.f32 %v20, %v34
  %v61 = vadd.f32 %v21, %v39
  %v62 = vadd.f32 %v22, %v39
  %v63 = vadd.f32 %v23, %v44
  %v64 = vadd.f32 %v24, %v44
  %v65 = vadd.f32 %v25, %v49
  %v66 = vadd.f32 %v26, %v49
  %67 = vst [vmem:[%s2] sm:$0xff] %v51
  %68 = vst [vmem:[%s2 + $0x8] sm:$0xff] %v52
  %69 = vst [vmem:[%s2 + $0x40] sm:$0xff] %v53
  %70 = vst [vmem:[%s2 + $0x48] sm:$0xff] %v54
  %71 = vst [vmem:[%s2 + $0x80] sm:$0xff] %v55
  %72 = vst [vmem:[%s2 + $0x88] sm:$0xff] %v56
  %73 = vst [vmem:[%s2 + $0xc0] sm:$0x7] %v57
  %74 = vst [vmem:[%s2 + $0xc8] sm:$0x7] %v58
  %75 = vst [vmem:[%s2 + $0x100] sm:$0xff] %v59
  %76 = vst [vmem:[%s2 + $0x108] sm:$0xff] %v60
  %77 = vst [vmem:[%s2 + $0x140] sm:$0xff] %v61
  %78 = vst [vmem:[%s2 + $0x148] sm:$0xff] %v62
  %79 = vst [vmem:[%s2 + $0x180] sm:$0xff] %v63
  %80 = vst [vmem:[%s2 + $0x188] sm:$0xff] %v64
  %81 = vst [vmem:[%s2 + $0x1c0] sm:$0x7] %v65
  %82 = vst [vmem:[%s2 + $0x1c8] sm:$0x7] %v66
  %v83 = vld [vmem:[%s1] sm:$0xff]
  %v84 = vld [vmem:[%s1 + $0x8] sm:$0xff]
  %v85 = vld [vmem:[%s1 + $0x10] sm:$0xff]
  %v86 = vld [vmem:[%s1 + $0x18] sm:$0x7]
  %88 = vset.pattern.permute.xlu0 1
  %89 = vperm.xlu0 %88, %v83
  %v90 = vpop.permute.xlu0 %89
  %93 = vset.pattern.permute.xlu0 1
  %94 = vperm.xlu0 %93, %v84
  %v95 = vpop.permute.xlu0 %94
  %98 = vset.pattern.permute.xlu0 1
  %99 = vperm.xlu0 %98, %v85
  %v100 = vpop.permute.xlu0 %99
  %103 = vset.pattern.permute.xlu0 1
  %104 = vperm.xlu0 %103, %v86
  %v105 = vpop.permute.xlu0 %104
  %v107 = vadd.f32 %v11, %v90
  %v108 = vadd.f32 %v12, %v90
  %v109 = vadd.f32 %v13, %v95
  %v110 = vadd.f32 %v14, %v95
  %v111 = vadd.f32 %v15, %v100
  %v112 = vadd.f32 %v16, %v100
  %v113 = vadd.f32 %v17, %v105
  %v114 = vadd.f32 %v18, %v105
  %v115 = vadd.f32 %v19, %v90
  %v116 = vadd.f32 %v20, %v90
  %v117 = vadd.f32 %v21, %v95
  %v118 = vadd.f32 %v22, %v95
  %v119 = vadd.f32 %v23, %v100
  %v120 = vadd.f32 %v24, %v100
  %v121 = vadd.f32 %v25, %v105
  %v122 = vadd.f32 %v26, %v105
  %123 = vst [vmem:[%s2 + $0x10] sm:$0xff] %v107
  %124 = vst [vmem:[%s2 + $0x18] sm:$0xff] %v108
  %125 = vst [vmem:[%s2 + $0x50] sm:$0xff] %v109
  %126 = vst [vmem:[%s2 + $0x58] sm:$0xff] %v110
  %127 = vst [vmem:[%s2 + $0x90] sm:$0xff] %v111
  %128 = vst [vmem:[%s2 + $0x98] sm:$0xff] %v112
  %129 = vst [vmem:[%s2 + $0xd0] sm:$0x7] %v113
  %130 = vst [vmem:[%s2 + $0xd8] sm:$0x7] %v114
  %131 = vst [vmem:[%s2 + $0x110] sm:$0xff] %v115
  %132 = vst [vmem:[%s2 + $0x118] sm:$0xff] %v116
  %133 = vst [vmem:[%s2 + $0x150] sm:$0xff] %v117
  %134 = vst [vmem:[%s2 + $0x158] sm:$0xff] %v118
  %135 = vst [vmem:[%s2 + $0x190] sm:$0xff] %v119
  %136 = vst [vmem:[%s2 + $0x198] sm:$0xff] %v120
  %137 = vst [vmem:[%s2 + $0x1d0] sm:$0x7] %v121
  %138 = vst [vmem:[%s2 + $0x1d8] sm:$0x7] %v122
  %v139 = vld [vmem:[%s1] sm:$0xff]
  %v140 = vld [vmem:[%s1 + $0x8] sm:$0xff]
  %v141 = vld [vmem:[%s1 + $0x10] sm:$0xff]
  %v142 = vld [vmem:[%s1 + $0x18] sm:$0x7]
  %144 = vset.pattern.permute.xlu0 2
  %145 = vperm.xlu0 %144, %v139
  %v146 = vpop.permute.xlu0 %145
  %149 = vset.pattern.permute.xlu0 2
  %150 = vperm.xlu0 %149, %v140
  %v151 = vpop.permute.xlu0 %150
  %154 = vset.pattern.permute.xlu0 2
  %155 = vperm.xlu0 %154, %v141
  %v156 = vpop.permute.xlu0 %155
  %159 = vset.pattern.permute.xlu0 2
  %160 = vperm.xlu0 %159, %v142
  %v161 = vpop.permute.xlu0 %160
  %v163 = vadd.f32 %v11, %v146
  %v164 = vadd.f32 %v12, %v146
  %v165 = vadd.f32 %v13, %v151
  %v166 = vadd.f32 %v14, %v151
  %v167 = vadd.f32 %v15, %v156
  %v168 = vadd.f32 %v16, %v156
  %v169 = vadd.f32 %v17, %v161
  %v170 = vadd.f32 %v18, %v161
  %v171 = vadd.f32 %v19, %v146
  %v172 = vadd.f32 %v20, %v146
  %v173 = vadd.f32 %v21, %v151
  %v174 = vadd.f32 %v22, %v151
  %v175 = vadd.f32 %v23, %v156
  %v176 = vadd.f32 %v24, %v156
  %v177 = vadd.f32 %v25, %v161
  %v178 = vadd.f32 %v26, %v161
  %179 = vst [vmem:[%s2 + $0x20] sm:$0xff] %v163
  %180 = vst [vmem:[%s2 + $0x28] sm:$0xff] %v164
  %181 = vst [vmem:[%s2 + $0x60] sm:$0xff] %v165
  %182 = vst [vmem:[%s2 + $0x68] sm:$0xff] %v166
  %183 = vst [vmem:[%s2 + $0xa0] sm:$0xff] %v167
  %184 = vst [vmem:[%s2 + $0xa8] sm:$0xff] %v168
  %185 = vst [vmem:[%s2 + $0xe0] sm:$0x7] %v169
  %186 = vst [vmem:[%s2 + $0xe8] sm:$0x7] %v170
  %187 = vst [vmem:[%s2 + $0x120] sm:$0xff] %v171
  %188 = vst [vmem:[%s2 + $0x128] sm:$0xff] %v172
  %189 = vst [vmem:[%s2 + $0x160] sm:$0xff] %v173
  %190 = vst [vmem:[%s2 + $0x168] sm:$0xff] %v174
  %191 = vst [vmem:[%s2 + $0x1a0] sm:$0xff] %v175
  %192 = vst [vmem:[%s2 + $0x1a8] sm:$0xff] %v176
  %193 = vst [vmem:[%s2 + $0x1e0] sm:$0x7] %v177
  %194 = vst [vmem:[%s2 + $0x1e8] sm:$0x7] %v178
  %v195 = vld [vmem:[%s1] sm:$0xff]
  %v196 = vld [vmem:[%s1 + $0x8] sm:$0xff]
  %v197 = vld [vmem:[%s1 + $0x10] sm:$0xff]
  %v198 = vld [vmem:[%s1 + $0x18] sm:$0x7]
  %200 = vset.pattern.permute.xlu0 3
  %201 = vperm.xlu0 %200, %v195
  %v202 = vpop.permute.xlu0 %201
  %205 = vset.pattern.permute.xlu0 3
  %206 = vperm.xlu0 %205, %v196
  %v207 = vpop.permute.xlu0 %206
  %210 = vset.pattern.permute.xlu0 3
  %211 = vperm.xlu0 %210, %v197
  %v212 = vpop.permute.xlu0 %211
  %215 = vset.pattern.permute.xlu0 3
  %216 = vperm.xlu0 %215, %v198
  %v217 = vpop.permute.xlu0 %216
  %v219 = vadd.f32 %v11, %v202
  %v220 = vadd.f32 %v12, %v202
  %v221 = vadd.f32 %v13, %v207
  %v222 = vadd.f32 %v14, %v207
  %v223 = vadd.f32 %v15, %v212
  %v224 = vadd.f32 %v16, %v212
  %v225 = vadd.f32 %v17, %v217
  %v226 = vadd.f32 %v18, %v217
  %v227 = vadd.f32 %v19, %v202
  %v228 = vadd.f32 %v20, %v202
  %v229 = vadd.f32 %v21, %v207
  %v230 = vadd.f32 %v22, %v207
  %v231 = vadd.f32 %v23, %v212
  %v232 = vadd.f32 %v24, %v212
  %v233 = vadd.f32 %v25, %v217
  %v234 = vadd.f32 %v26, %v217
  %235 = vst [vmem:[%s2 + $0x30] sm:$0xff] %v219
  %236 = vst [vmem:[%s2 + $0x38] sm:$0xff] %v220
  %237 = vst [vmem:[%s2 + $0x70] sm:$0xff] %v221
  %238 = vst [vmem:[%s2 + $0x78] sm:$0xff] %v222
  %239 = vst [vmem:[%s2 + $0xb0] sm:$0xff] %v223
  %240 = vst [vmem:[%s2 + $0xb8] sm:$0xff] %v224
  %241 = vst [vmem:[%s2 + $0xf0] sm:$0x7] %v225
  %242 = vst [vmem:[%s2 + $0xf8] sm:$0x7] %v226
  %243 = vst [vmem:[%s2 + $0x130] sm:$0xff] %v227
  %244 = vst [vmem:[%s2 + $0x138] sm:$0xff] %v228
  %245 = vst [vmem:[%s2 + $0x170] sm:$0xff] %v229
  %246 = vst [vmem:[%s2 + $0x178] sm:$0xff] %v230
  %247 = vst [vmem:[%s2 + $0x1b0] sm:$0xff] %v231
  %248 = vst [vmem:[%s2 + $0x1b8] sm:$0xff] %v232
  %249 = vst [vmem:[%s2 + $0x1f0] sm:$0x7] %v233
  %250 = vst [vmem:[%s2 + $0x1f8] sm:$0x7] %v234
  // Predicated region
  $region10: #{tpu_custom_call.1} parent=0 // pred_check
    _
  $region11: #{tpu_custom_call.1} parent=0 // pred_check_branch
    %252 = sbr.rel (0) target = $region13
  $region12: #{tpu_custom_call.1} parent=0 // pred_region
    _
  $region13: #{tpu_custom_call.1} parent=0 // pred_fallthru
    _
  // Predicated region
  $region14: #{tpu_custom_call.1} parent=0 // pred_check
    _
  $region15: #{tpu_custom_call.1} parent=0 // pred_check_branch
    %254 = sbr.rel (0) target = $region17
  $region16: #{tpu_custom_call.1} parent=0 // pred_region
    _
  $region17: #{tpu_custom_call.1} parent=0 // pred_fallthru
    _

</llo_original>
